<compile_context>
chip_gen: v6e
topology: v6e:2x2x1
jax: 0.10.0
libtpu: 0.0.40
codegen_flags: <defaults>
</compile_context>

<pallas_src>
import functools

import jax
import jax.numpy as jnp
from jax.experimental import pallas as pl
from jax.experimental.pallas import tpu as pltpu


# ---------------------------------------------------------------------------
# Chip-aware tuning: per-sequence-block DMA budget and scoped-VMEM limit.
# ---------------------------------------------------------------------------
def _chip_tuning():
    """Returns (seq_block_budget_bytes, vmem_limit_bytes)."""
    vmem_cap = None
    try:
        vmem_cap = int(pltpu.get_tpu_info().vmem_capacity_bytes)
    except Exception:  # pragma: no cover - API/backend not available
        vmem_cap = None
    kind = ""
    try:
        kind = jax.devices()[0].device_kind.lower()
    except Exception:  # pragma: no cover
        kind = ""

    if vmem_cap is not None and vmem_cap <= (80 << 20):
        # v7x-class: only 64 MiB VMEM per TensorCore -> smaller blocks, and
        # keep the scoped limit well under the physical capacity.
        budget, limit = 6 << 20, 48 << 20
    elif "v5" in kind:
        # v5e: lower HBM BW; ~4 MiB blocks already sit near roofline.
        budget, limit = 4 << 20, 32 << 20
    elif vmem_cap is not None:
        # v6e-class (128 MiB physical): fat blocks + raised scoped limit.
        budget, limit = 8 << 20, 64 << 20
    else:
        # Unknown backend: conservative (fits every generation's default).
        budget, limit = 4 << 20, 32 << 20

    if vmem_cap is not None:
        limit = min(limit, (vmem_cap * 3) // 4)
    return budget, limit


# ---------------------------------------------------------------------------
# Fused MLP helpers (MXU matmuls, f32 accumulation)
# ---------------------------------------------------------------------------
def _mlp(feat, w1_ref, b1_ref, w2_ref, b2_ref):
    h = jnp.dot(feat, w1_ref[...], preferred_element_type=jnp.float32)
    h = jnp.maximum(h + b1_ref[...].astype(jnp.float32), 0.0)
    out = jnp.dot(h, w2_ref[...], preferred_element_type=jnp.float32)
    return out + b2_ref[...].astype(jnp.float32)


def _dual_features(p0, p1):
    # [X0, X1, X0*X1, X0-X1] along the feature (lane) dim -> one K=4D MXU dot.
    return jnp.concatenate([p0, p1, p0 * p1, p0 - p1], axis=-1)


def _unfold_lanes(acc, fold, d):
    # acc: (b, fold*d) lane-folded pooled sum -> (b, d).  Runs once per batch
    # tile (inside the final pl.when), so the lane shuffles are negligible.
    if fold == 1:
        return acc
    out = acc[:, 0:d]
    for i in range(1, fold):
        out = out + acc[:, i * d:(i + 1) * d]
    return out


# ---------------------------------------------------------------------------
# Kernels
# ---------------------------------------------------------------------------
def _mean_single_kernel(x_ref, w1_ref, b1_ref, w2_ref, b2_ref, o_ref,
                        acc0, *, fold, d, inv_s):
    s = pl.program_id(1)

    @pl.when(s == 0)
    def _():
        acc0[...] = jnp.zeros_like(acc0)

    # Pooled-sum over the (folded) S axis, f32 accumulate without
    # materializing an f32 copy of the whole block.
    acc0[...] += jnp.sum(x_ref[...], axis=1, dtype=jnp.float32)

    @pl.when(s == pl.num_programs(1) - 1)
    def _():
        pooled = _unfold_lanes(acc0[...], fold, d) * jnp.float32(inv_s)
        out = _mlp(pooled, w1_ref, b1_ref, w2_ref, b2_ref)
        o_ref[...] = out.astype(o_ref.dtype)


def _mean_dual_kernel(x0_ref, x1_ref, w1_ref, b1_ref, w2_ref, b2_ref, o_ref,
                      acc0, acc1, *, fold, d, inv_s):
    s = pl.program_id(1)

    @pl.when(s == 0)
    def _():
        acc0[...] = jnp.zeros_like(acc0)
        acc1[...] = jnp.zeros_like(acc1)

    acc0[...] += jnp.sum(x0_ref[...], axis=1, dtype=jnp.float32)
    acc1[...] += jnp.sum(x1_ref[...], axis=1, dtype=jnp.float32)

    @pl.when(s == pl.num_programs(1) - 1)
    def _():
        inv = jnp.float32(inv_s)
        p0 = _unfold_lanes(acc0[...], fold, d) * inv
        p1 = _unfold_lanes(acc1[...], fold, d) * inv
        feat = _dual_features(p0, p1)
        out = _mlp(feat, w1_ref, b1_ref, w2_ref, b2_ref)
        o_ref[...] = out.astype(o_ref.dtype)


def _cls_single_kernel(x_ref, w1_ref, b1_ref, w2_ref, b2_ref, o_ref):
    pooled = x_ref[...].astype(jnp.float32)
    o_ref[...] = _mlp(pooled, w1_ref, b1_ref, w2_ref, b2_ref).astype(o_ref.dtype)


def _cls_dual_kernel(x0_ref, x1_ref, w1_ref, b1_ref, w2_ref, b2_ref, o_ref):
    p0 = x0_ref[...].astype(jnp.float32)
    p1 = x1_ref[...].astype(jnp.float32)
    feat = _dual_features(p0, p1)
    o_ref[...] = _mlp(feat, w1_ref, b1_ref, w2_ref, b2_ref).astype(o_ref.dtype)


# ---------------------------------------------------------------------------
# Tiling helpers
# ---------------------------------------------------------------------------
def _pick_tile(n, cap, align):
    """Largest t with t | n, t <= cap (roughly), t % align == 0; else n."""
    n, cap, align = int(n), int(cap), int(align)
    if n <= cap:
        return n
    start = max(align, (min(cap, n) // align) * align)
    for t in range(start, 0, -align):
        if n % t == 0:
            return t
    return n


def _sublane_align(dtype):
    # f32 -> 8, bf16 -> 16, int8/fp8 -> 32 packed rows per sublane group.
    return max(8, 32 // int(jnp.dtype(dtype).itemsize))


# ---------------------------------------------------------------------------
# Wrapper
# ---------------------------------------------------------------------------
def schead_forward(params, inp_0, inp_1=None, *, pooling_mode="MEAN",
                   dual_input=False, block_b=None, block_s=None):
    """Pallas implementation of SCHead.forward.

    params: dict with 'w1' (Din, H), 'b1' (H,) or (1, H), 'w2' (H, C),
            'b2' (C,) or (1, C), where Din = D * (4 if dual_input else 1).
    inp_0/inp_1: (B, S, D) arrays (f32 or bf16).
    block_b / block_s: optional manual tiles.  block_s is in units of the
        lane-folded sequence axis (S // (128//D) when D < 128 and 128 % D == 0
        and S divides evenly; otherwise plain S).
    Returns (B, C) float32 logits.
    """
    if pooling_mode not in ("MEAN", "CLS"):
        raise ValueError(f"Unsupported pooling_mode: {pooling_mode!r}")
    dual = bool(dual_input)
    if dual and inp_1 is None:
        raise ValueError("dual_input=True requires inp_1 "
                         "(params['w1'] expects 4*D input features)")

    B, S, D = inp_0.shape
    w1 = params["w1"]
    b1 = jnp.reshape(params["b1"], (1, -1))
    w2 = params["w2"]
    b2 = jnp.reshape(params["b2"], (1, -1))
    H, C = w1.shape[1], w2.shape[1]
    din = w1.shape[0]
    if din != (4 * D if dual else D):
        raise ValueError(f"w1 has {din} input features, expected "
                         f"{4 * D if dual else D}")
    if dual and inp_1.shape != inp_0.shape:
        raise ValueError("inp_0 and inp_1 must have the same shape")

    itemsize = int(jnp.dtype(inp_0.dtype).itemsize)
    in_align = _sublane_align(inp_0.dtype)
    n_seq = 2 if dual else 1
    budget, vmem_limit = _chip_tuning()
    # Budget is per sequence-input block (double-buffered by the pipeline);
    # a single-input head can afford 2x fatter blocks.
    block_budget = budget * (2 // n_seq)

    out_shape = jax.ShapeDtypeStruct((B, C), jnp.float32)

    if pooling_mode == "MEAN":
        # --- lane-dense folding: (B, S, D) -> (B, S/f, f*D), f = 128//D ----
        fold = 1
        if D < 128 and 128 % D == 0:
            f = 128 // D
            if S % f == 0:
                fold = f
        S_f, D_f = S // fold, D * fold
        x0 = inp_0.reshape(B, S_f, D_f) if fold > 1 else inp_0
        x1 = (inp_1.reshape(B, S_f, D_f) if (dual and fold > 1) else inp_1)

        # --- batch tile (f32 output => 8-row sublane alignment) -----------
        b_align = 8
        if block_b is None:
            b_cap = min(128, B)
            if B >= 16:  # force >= 2 batch tiles so v7x's 2nd TC gets work
                half = ((B // 2) // b_align) * b_align
                if half >= b_align:
                    b_cap = min(b_cap, half)
            b_tile = _pick_tile(B, b_cap, b_align)
        else:
            b_tile = int(block_b)
            if b_tile != B:
                assert B % b_tile == 0, "block_b must divide the batch size"
                assert b_tile % b_align == 0, "block_b must be a multiple of 8"
        nb = B // b_tile

        # --- sequence tile (on the folded axis, dtype-aware alignment) ----
        if block_s is None:
            s_cap = max(1, block_budget // max(1, b_tile * D_f * itemsize))
            s_tile = _pick_tile(S_f, s_cap, in_align)
        else:
            s_tile = int(block_s)
            if s_tile != S_f:
                assert S_f % s_tile == 0, (
                    f"block_s must divide the (lane-folded) sequence length "
                    f"{S_f}")
                assert s_tile % in_align == 0, (
                    f"block_s must be a multiple of {in_align} for dtype "
                    f"{inp_0.dtype}")
        ns = S_f // s_tile

        grid = (nb, ns)
        dims = ("parallel", "arbitrary")
        x_spec = pl.BlockSpec((b_tile, s_tile, D_f), lambda b, s: (b, s, 0))
        w_spec = lambda w: pl.BlockSpec(w.shape, lambda b, s: (0, 0))
        out_spec = pl.BlockSpec((b_tile, C), lambda b, s: (b, 0))

        if dual:
            kernel = functools.partial(_mean_dual_kernel, fold=fold, d=D,
                                       inv_s=1.0 / S)
            operands = (x0, x1, w1, b1, w2, b2)
            in_specs = [x_spec, x_spec, w_spec(w1), w_spec(b1), w_spec(w2),
                        w_spec(b2)]
            scratch = [pltpu.VMEM((b_tile, D_f), jnp.float32),
                       pltpu.VMEM((b_tile, D_f), jnp.float32)]
        else:
            kernel = functools.partial(_mean_single_kernel, fold=fold, d=D,
                                       inv_s=1.0 / S)
            operands = (x0, w1, b1, w2, b2)
            in_specs = [x_spec, w_spec(w1), w_spec(b1), w_spec(w2), w_spec(b2)]
            scratch = [pltpu.VMEM((b_tile, D_f), jnp.float32)]

        bytes_seq = n_seq * B * S * D * itemsize
        pool_flops = n_seq * B * S * D
    else:  # CLS: slice the CLS row in the wrapper -> dense (B, D) operand.
        x0 = inp_0[:, 0, :]
        x1 = inp_1[:, 0, :] if dual else None

        b_align = max(8, in_align)  # b is the second-to-last dim of the input
        if block_b is None:
            b_cap = min(512, B)
            if B >= 16 and B >= 2 * b_align:
                half = ((B // 2) // b_align) * b_align
                if half >= b_align:
                    b_cap = min(b_cap, half)
            b_tile = _pick_tile(B, b_cap, b_align)
        else:
            b_tile = int(block_b)
            if b_tile != B:
                assert B % b_tile == 0, "block_b must divide the batch size"
                assert b_tile % b_align == 0, (
                    f"block_b must be a multiple of {b_align}")
        nb = B // b_tile

        grid = (nb,)
        dims = ("parallel",)
        x_spec = pl.BlockSpec((b_tile, D), lambda b: (b, 0))
        w_spec = lambda w: pl.BlockSpec(w.shape, lambda b: (0, 0))
        out_spec = pl.BlockSpec((b_tile, C), lambda b: (b, 0))

        if dual:
            kernel = _cls_dual_kernel
            operands = (x0, x1, w1, b1, w2, b2)
            in_specs = [x_spec, x_spec, w_spec(w1), w_spec(b1), w_spec(w2),
                        w_spec(b2)]
        else:
            kernel = _cls_single_kernel
            operands = (x0, w1, b1, w2, b2)
            in_specs = [x_spec, w_spec(w1), w_spec(b1), w_spec(w2), w_spec(b2)]
        scratch = []
        bytes_seq = n_seq * B * D * itemsize
        pool_flops = 0

    weight_bytes = sum(int(jnp.dtype(w.dtype).itemsize) * int(w.size)
                       for w in (w1, b1, w2, b2))
    cost = pl.CostEstimate(
        flops=int(2 * B * (din * H + H * C) + pool_flops),
        transcendentals=0,
        bytes_accessed=int(bytes_seq + weight_bytes + B * C * 4),
    )

    return pl.pallas_call(
        kernel,
        out_shape=out_shape,
        grid_spec=pltpu.PrefetchScalarGridSpec(
            num_scalar_prefetch=0,
            grid=grid,
            in_specs=in_specs,
            out_specs=out_spec,
            scratch_shapes=scratch,
        ),
        compiler_params=pltpu.CompilerParams(
            dimension_semantics=dims,
            vmem_limit_bytes=int(vmem_limit),
        ),
        cost_estimate=cost,
    )(*operands)


# ---------------------------------------------------------------------------
# Pure-JAX reference (for correctness check)
# ---------------------------------------------------------------------------
def schead_ref(params, inp_0, inp_1=None, *, pooling_mode="MEAN",
               dual_input=False):
    def pool(x):
        x = x.astype(jnp.float32)
        return jnp.mean(x, axis=1) if pooling_mode == "MEAN" else x[:, 0, :]

    p0 = pool(inp_0)
    if dual_input and inp_1 is not None:
        p1 = pool(inp_1)
        feat = jnp.concatenate([p0, p1, p0 * p1, p0 - p1], axis=-1)
    else:
        feat = p0
    b1 = jnp.reshape(params["b1"], (1, -1))
    b2 = jnp.reshape(params["b2"], (1, -1))
    h = jnp.maximum(feat @ params["w1"] + b1, 0.0)
    return h @ params["w2"] + b2


# ---------------------------------------------------------------------------
# Deterministic parameter init (shapes from SCHead.__init__)
# ---------------------------------------------------------------------------
def init_params(key, d_in, hidden, num_classes):
    k1, k2 = jax.random.split(key)
    lim1 = 1.0 / (d_in ** 0.5)
    lim2 = 1.0 / (hidden ** 0.5)
    return {
        "w1": jax.random.uniform(k1, (d_in, hidden), jnp.float32, -lim1, lim1),
        "b1": jnp.zeros((1, hidden), jnp.float32),
        "w2": jax.random.uniform(k2, (hidden, num_classes), jnp.float32,
                                 -lim2, lim2),
        "b2": jnp.zeros((1, num_classes), jnp.float32),
    }


if __name__ == "__main__":
    # config: transformer_dim=32, transformer_hidden_dim=64, num_classes=10
    B, S, D, H, C = 2, 8, 32, 64, 10
    key = jax.random.PRNGKey(0)
    ks = jax.random.split(key, 8)

    x0 = jax.random.normal(ks[0], (B, S, D), jnp.float32)
    x1 = jax.random.normal(ks[1], (B, S, D), jnp.float32)

    # ---- single-input head, MEAN pooling (lane-folded, f=4) ----
    p_s = init_params(ks[2], D, H, C)
    out = jax.block_until_ready(schead_forward(p_s, x0, pooling_mode="MEAN"))
    ref = schead_ref(p_s, x0, pooling_mode="MEAN")
    assert out.shape == (B, C)
    assert jnp.allclose(out, ref, atol=1e-4, rtol=1e-4)

    # ---- single-input head, CLS pooling (dense (B, D) operand) ----
    out = jax.block_until_ready(schead_forward(p_s, x0, pooling_mode="CLS"))
    ref = schead_ref(p_s, x0, pooling_mode="CLS")
    assert jnp.allclose(out, ref, atol=1e-4, rtol=1e-4)

    # ---- dual-input head, MEAN pooling ----
    p_d = init_params(ks[3], 4 * D, H, C)
    out = jax.block_until_ready(
        schead_forward(p_d, x0, x1, pooling_mode="MEAN", dual_input=True))
    ref = schead_ref(p_d, x0, x1, pooling_mode="MEAN", dual_input=True)
    assert jnp.allclose(out, ref, atol=1e-4, rtol=1e-4)

    # ---- dual-input head, CLS pooling ----
    out = jax.block_until_ready(
        schead_forward(p_d, x0, x1, pooling_mode="CLS", dual_input=True))
    ref = schead_ref(p_d, x0, x1, pooling_mode="CLS", dual_input=True)
    assert jnp.allclose(out, ref, atol=1e-4, rtol=1e-4)

    # ---- dual-input MEAN with a real (batch x folded-seq) grid: exercises
    # ---- the pooled-sum scratch accumulator + parallel/arbitrary axes ----
    B2, S2 = 16, 256
    y0 = jax.random.normal(ks[4], (B2, S2, D), jnp.float32)
    y1 = jax.random.normal(ks[5], (B2, S2, D), jnp.float32)
    out = jax.block_until_ready(
        schead_forward(p_d, y0, y1, pooling_mode="MEAN", dual_input=True,
                       block_b=8, block_s=8))
    ref = schead_ref(p_d, y0, y1, pooling_mode="MEAN", dual_input=True)
    assert out.shape == (B2, C)
    assert jnp.allclose(out, ref, atol=1e-3, rtol=1e-3)

    # ---- D = 128: no lane folding, multi-step S reduction ----
    D3 = 128
    p3 = init_params(ks[6], D3, H, C)
    z0 = jax.random.normal(ks[7], (8, 32, D3), jnp.float32)
    out = jax.block_until_ready(
        schead_forward(p3, z0, pooling_mode="MEAN", block_s=8))
    ref = schead_ref(p3, z0, pooling_mode="MEAN")
    assert jnp.allclose(out, ref, atol=1e-3, rtol=1e-3)

    # ---- bf16 input: dtype-aware (16-row) sequence tile alignment ----
    yb = y0.astype(jnp.bfloat16)
    out = jax.block_until_ready(
        schead_forward(p_s, yb, pooling_mode="MEAN", block_b=8, block_s=16))
    ref = schead_ref(p_s, yb, pooling_mode="MEAN")
    assert jnp.allclose(out, ref, atol=2e-2, rtol=2e-2)

    print("KERNEL_OK")
</pallas_src>

<mosaic_0001>
module attributes {stable_mosaic.version = 11 : i64} {
  func.func @_mean_single_kernel(%arg0: i32, %arg1: i32, %arg2: memref<2x2x128xf32, #tpu.memory_space<vmem>>, %arg3: memref<32x64xf32, #tpu.memory_space<vmem>>, %arg4: memref<1x64xf32, #tpu.memory_space<vmem>>, %arg5: memref<64x10xf32, #tpu.memory_space<vmem>>, %arg6: memref<1x10xf32, #tpu.memory_space<vmem>>, %arg7: memref<2x10xf32, #tpu.memory_space<vmem>>, %arg8: memref<2x128xf32, #tpu.memory_space<vmem>>) attributes {dimension_semantics = [#tpu.dimension_semantics<parallel>, #tpu.dimension_semantics<arbitrary>], iteration_bounds = array<i64: 1, 1>, scalar_prefetch = 0 : i64, scratch_operands = 1 : i64, tpu.core_type = #tpu.core_type<tc>, window_params = [{transform_indices = @transform_0, window_bounds = array<i64: 2, 2, 128>}, {pipeline_mode = #tpu.pipeline_mode<synchronous>, transform_indices = @transform_1, window_bounds = array<i64: 32, 64>}, {pipeline_mode = #tpu.pipeline_mode<synchronous>, transform_indices = @transform_2, window_bounds = array<i64: 1, 64>}, {pipeline_mode = #tpu.pipeline_mode<synchronous>, transform_indices = @transform_3, window_bounds = array<i64: 64, 10>}, {pipeline_mode = #tpu.pipeline_mode<synchronous>, transform_indices = @transform_4, window_bounds = array<i64: 1, 10>}, {transform_indices = @transform_5, window_bounds = array<i64: 2, 10>}]} {
    %c0_i32 = arith.constant 0 : i32
    %0 = arith.cmpi eq, %arg1, %c0_i32 : i32
    %1 = arith.extui %0 : i1 to i32
    %c0_i32_0 = arith.constant 0 : i32
    %2 = arith.cmpi ne, %1, %c0_i32_0 : i32
    scf.if %2 {
      %cst_9 = arith.constant 0.000000e+00 : f32
      %11 = vector.broadcast %cst_9 : f32 to vector<2x128xf32>
      %c0_10 = arith.constant 0 : index
      %c0_11 = arith.constant 0 : index
      %12 = vector.load %arg8[%c0_10, %c0_11] : memref<2x128xf32, #tpu.memory_space<vmem>>, vector<2x128xf32>
      tpu.vector_store %arg8[%c0_10, %c0_11], %11 {strides = array<i32>} : memref<2x128xf32, #tpu.memory_space<vmem>>, vector<2x128xf32>,
    } else {
    }
    %c0 = arith.constant 0 : index
    %c0_1 = arith.constant 0 : index
    %3 = vector.load %arg8[%c0, %c0_1] : memref<2x128xf32, #tpu.memory_space<vmem>>, vector<2x128xf32>
    %c0_2 = arith.constant 0 : index
    %c0_3 = arith.constant 0 : index
    %c0_4 = arith.constant 0 : index
    %4 = vector.load %arg2[%c0_2, %c0_3, %c0_4] : memref<2x2x128xf32, #tpu.memory_space<vmem>>, vector<2x2x128xf32>
    %cst = arith.constant dense<0.000000e+00> : vector<2x128xf32>
    %5 = vector.multi_reduction <add>, %4, %cst [1] : vector<2x2x128xf32> to vector<2x128xf32>
    %6 = arith.addf %3, %5 : vector<2x128xf32>
    %c0_5 = arith.constant 0 : index
    %c0_6 = arith.constant 0 : index
    %7 = vector.load %arg8[%c0_5, %c0_6] : memref<2x128xf32, #tpu.memory_space<vmem>>, vector<2x128xf32>
    tpu.vector_store %arg8[%c0_5, %c0_6], %6 {strides = array<i32>} : memref<2x128xf32, #tpu.memory_space<vmem>>, vector<2x128xf32>,
    %c0_i32_7 = arith.constant 0 : i32
    %8 = arith.cmpi eq, %arg1, %c0_i32_7 : i32
    %9 = arith.extui %8 : i1 to i32
    %c0_i32_8 = arith.constant 0 : i32
    %10 = arith.cmpi ne, %9, %c0_i32_8 : i32
    scf.if %10 {
      %c0_9 = arith.constant 0 : index
      %c0_10 = arith.constant 0 : index
      %11 = vector.load %arg8[%c0_9, %c0_10] : memref<2x128xf32, #tpu.memory_space<vmem>>, vector<2x128xf32>
      %12 = vector.extract_strided_slice %11 {offsets = [0, 0], sizes = [2, 32], strides = [1, 1]} : vector<2x128xf32> to vector<2x32xf32>
      %13 = vector.extract_strided_slice %11 {offsets = [0, 32], sizes = [2, 32], strides = [1, 1]} : vector<2x128xf32> to vector<2x32xf32>
      %14 = arith.addf %12, %13 : vector<2x32xf32>
      %15 = vector.extract_strided_slice %11 {offsets = [0, 64], sizes = [2, 32], strides = [1, 1]} : vector<2x128xf32> to vector<2x32xf32>
      %16 = arith.addf %14, %15 : vector<2x32xf32>
      %17 = vector.extract_strided_slice %11 {offsets = [0, 96], sizes = [2, 32], strides = [1, 1]} : vector<2x128xf32> to vector<2x32xf32>
      %18 = arith.addf %16, %17 : vector<2x32xf32>
      %cst_11 = arith.constant 1.250000e-01 : f32
      %19 = vector.broadcast %cst_11 : f32 to vector<2x32xf32>
      %20 = arith.mulf %18, %19 : vector<2x32xf32>
      %c0_12 = arith.constant 0 : index
      %c0_13 = arith.constant 0 : index
      %21 = vector.load %arg3[%c0_12, %c0_13] : memref<32x64xf32, #tpu.memory_space<vmem>>, vector<32x64xf32>
      %cst_14 = arith.constant dense<0.000000e+00> : vector<2x64xf32>
      %22 = tpu.matmul %20, %21, %cst_14 {dimension_numbers = #tpu.dot_dimension_numbers<[1], [0], [0], [1], [0, 0, 1, 1], [], []>} : vector<2x32xf32>, vector<32x64xf32>, vector<2x64xf32> -> vector<2x64xf32>
      %c0_15 = arith.constant 0 : index
      %c0_16 = arith.constant 0 : index
      %23 = vector.load %arg4[%c0_15, %c0_16] : memref<1x64xf32, #tpu.memory_space<vmem>>, vector<1x64xf32>
      %24 = vector.broadcast %23 : vector<1x64xf32> to vector<2x64xf32>
      %25 = arith.addf %22, %24 : vector<2x64xf32>
      %cst_17 = arith.constant 0.000000e+00 : f32
      %26 = vector.broadcast %cst_17 : f32 to vector<2x64xf32>
      %27 = arith.maximumf %25, %26 : vector<2x64xf32>
      %c0_18 = arith.constant 0 : index
      %c0_19 = arith.constant 0 : index
      %28 = vector.load %arg5[%c0_18, %c0_19] : memref<64x10xf32, #tpu.memory_space<vmem>>, vector<64x10xf32>
      %cst_20 = arith.constant dense<0.000000e+00> : vector<2x10xf32>
      %29 = tpu.matmul %27, %28, %cst_20 {dimension_numbers = #tpu.dot_dimension_numbers<[1], [0], [0], [1], [0, 0, 1, 1], [], []>} : vector<2x64xf32>, vector<64x10xf32>, vector<2x10xf32> -> vector<2x10xf32>
      %c0_21 = arith.constant 0 : index
      %c0_22 = arith.constant 0 : index
      %30 = vector.load %arg6[%c0_21, %c0_22] : memref<1x10xf32, #tpu.memory_space<vmem>>, vector<1x10xf32>
      %31 = vector.broadcast %30 : vector<1x10xf32> to vector<2x10xf32>
      %32 = arith.addf %29, %31 : vector<2x10xf32>
      %c0_23 = arith.constant 0 : index
      %c0_24 = arith.constant 0 : index
      %33 = vector.load %arg7[%c0_23, %c0_24] : memref<2x10xf32, #tpu.memory_space<vmem>>, vector<2x10xf32>
      tpu.vector_store %arg7[%c0_23, %c0_24], %32 {strides = array<i32>} : memref<2x10xf32, #tpu.memory_space<vmem>>, vector<2x10xf32>,
    } else {
    }
    return
  }
  func.func @transform_0(%arg0: i32, %arg1: i32) -> (i32, i32, i32) {
    %c0_i32 = arith.constant 0 : i32
    %c0_i32_0 = arith.constant 0 : i32
    return %arg0, %arg1, %c0_i32 : i32, i32, i32
  }
  func.func @transform_1(%arg0: i32, %arg1: i32) -> (i32, i32) {
    %c0_i32 = arith.constant 0 : i32
    %c0_i32_0 = arith.constant 0 : i32
    %c0_i32_1 = arith.constant 0 : i32
    return %c0_i32, %c0_i32_0 : i32, i32
  }
  func.func @transform_2(%arg0: i32, %arg1: i32) -> (i32, i32) {
    %c0_i32 = arith.constant 0 : i32
    %c0_i32_0 = arith.constant 0 : i32
    %c0_i32_1 = arith.constant 0 : i32
    return %c0_i32, %c0_i32_0 : i32, i32
  }
  func.func @transform_3(%arg0: i32, %arg1: i32) -> (i32, i32) {
    %c0_i32 = arith.constant 0 : i32
    %c0_i32_0 = arith.constant 0 : i32
    %c0_i32_1 = arith.constant 0 : i32
    return %c0_i32, %c0_i32_0 : i32, i32
  }
  func.func @transform_4(%arg0: i32, %arg1: i32) -> (i32, i32) {
    %c0_i32 = arith.constant 0 : i32
    %c0_i32_0 = arith.constant 0 : i32
    %c0_i32_1 = arith.constant 0 : i32
    return %c0_i32, %c0_i32_0 : i32, i32
  }
  func.func @transform_5(%arg0: i32, %arg1: i32) -> (i32, i32) {
    %c0_i32 = arith.constant 0 : i32
    %c0_i32_0 = arith.constant 0 : i32
    return %arg0, %c0_i32 : i32, i32
  }
}

</mosaic_0001>

<llo_original>
// kernel: tpu_custom_call.1
$region0: #{tpu_custom_call.1}
  #allocation0 [shape = 'u32[]', space=smem, size = 0x4, offset = 0x4, fixed_abs, tag = 'smem constant byte address 0x4 - core index']
  #allocation1 [shape = 'u32[144,128]{1,0:T(1,128)}', space=vmem, size = 0x12000, scoped, tag = 'internal scratch']
  #allocation2 [shape = 'f32[2,128]{1,0:T(2,128)}', space=vmem, size = 0x400, scoped, tag = 'scratch operand']
  %s0 = inlined_call_operand.vmem [shape: f32[2,2,128], index: 0, kind: input, shape index: {}]
  %s1 = inlined_call_operand.vmem [shape: f32[32,64], index: 1, kind: input, shape index: {}]
  %s2 = inlined_call_operand.vmem [shape: f32[1,64], index: 2, kind: input, shape index: {}]
  %s3 = inlined_call_operand.vmem [shape: f32[64,10], index: 3, kind: input, shape index: {}]
  %s4 = inlined_call_operand.vmem [shape: f32[1,10], index: 4, kind: input, shape index: {}]
  %s5 = inlined_call_operand.hbm [shape: f32[2,10], index: 5, kind: output, shape index: {}]
  %s6 = sld [smem:[#allocation0]]
  $region38: #{tpu_custom_call.1} parent=0
    _
  %s8 = ssub.s32 1, %s6
  %s9 = scalar_select 0, %s8, %s6
  $region1: #{tpu_custom_call.1} parent=0
    #allocation3 [shape = 'u8[1024]{0}', space=vmem, size = 0x400, scoped, tag = 'output window, operand 0, single buffered']
    #allocation4 [shape = 's32[1]{0}', space=sflag, size = 0x4, scoped, tag = 'scoped memory for tpu_custom_call.1']
    %10 = vsyncpa [#allocation4], 0
    // Predicated region
    $region2: #{tpu_custom_call.1} parent=1 // pred_check
      _
    $region3: #{tpu_custom_call.1} parent=1 // pred_check_branch
      %12 = sbr.rel (0) target = $region5
    $region4: #{tpu_custom_call.1} parent=1 // pred_region
      _
    $region5: #{tpu_custom_call.1} parent=1 // pred_fallthru
      _
    // Predicated region
    $region6: #{tpu_custom_call.1} parent=1 // pred_check
      _
    $region7: #{tpu_custom_call.1} parent=1 // pred_check_branch
      %14 = sbr.rel (0) target = $region9
    $region8: #{tpu_custom_call.1} parent=1 // pred_region
      _
    $region9: #{tpu_custom_call.1} parent=1 // pred_fallthru
      _
    // Predicated region
    $region10: #{tpu_custom_call.1} parent=1 // pred_check
      _
    $region11: #{tpu_custom_call.1} parent=1 // pred_check_branch
      %16 = sbr.rel (0) target = $region13
    $region12: #{tpu_custom_call.1} parent=1 // pred_region
      _
    $region13: #{tpu_custom_call.1} parent=1 // pred_fallthru
      _
    // Predicated region
    $region14: #{tpu_custom_call.1} parent=1 // pred_check
      _
    $region15: #{tpu_custom_call.1} parent=1 // pred_check_branch
      %18 = sbr.rel (0) target = $region17
    $region16: #{tpu_custom_call.1} parent=1 // pred_region
      _
    $region17: #{tpu_custom_call.1} parent=1 // pred_fallthru
      _
    // Predicated region
    $region18: #{tpu_custom_call.1} parent=1 // pred_check
      _
    $region19: #{tpu_custom_call.1} parent=1 // pred_check_branch
      %20 = sbr.rel (0) target = $region21
    $region20: #{tpu_custom_call.1} parent=1 // pred_region
      _
    $region21: #{tpu_custom_call.1} parent=1 // pred_fallthru
      _
    %p21 = scmp.eq.s32.totalorder 0, 0
    // Predicated region
    $region22: #{tpu_custom_call.1} parent=1 // pred_check
      %p22 = pneg %p21
    $region23: #{tpu_custom_call.1} parent=1 // pred_check_branch
      %24 = sbr.rel (%p22) target = $region25
    $region24: #{tpu_custom_call.1} parent=1 // pred_region
      %25 = vst [vmem:[#allocation2] sm:$0x3] 0.0
    $region25: #{tpu_custom_call.1} parent=1 // pred_fallthru
      _
    %v26 = vld [vmem:[#allocation2] sm:$0x3]
    %v27 = vld [vmem:[%s0] sm:$0x3]
    %v28 = vld [vmem:[%s0 + $0x2] sm:$0x3]
    %vm29 = vcmask 1041408
    %v30 = vsel %vm29, %v27, 0.0
    %v31 = vrot.slane %v30, 4
    %v32 = vadd.f32 %v30, %v31
    %v33 = vrot.slane %v32, 2
    %v34 = vadd.f32 %v32, %v33
    %v35 = vrot.slane %v34, 1
    %v36 = vadd.f32 %v34, %v35
    %v37 = vsel %vm29, %v28, 0.0
    %v38 = vrot.slane %v37, 4
    %v39 = vadd.f32 %v37, %v38
    %v40 = vrot.slane %v39, 2
    %v41 = vadd.f32 %v39, %v40
    %v42 = vrot.slane %v41, 1
    %v43 = vadd.f32 %v41, %v42
    %vm46 = vcmask 1041409
    %v47 = vsel %vm46, %v43, %v36
    %v49 = vadd.f32 %v26, %v47
    %50 = vst [vmem:[#allocation2] sm:$0x3] %v49
    // Predicated region
    $region26: #{tpu_custom_call.1} parent=1 // pred_check
      %p51 = pneg %p21
    $region27: #{tpu_custom_call.1} parent=1 // pred_check_branch
      %53 = sbr.rel (%p51) target = $region29
    $region28: #{tpu_custom_call.1} parent=1 // pred_region
      %v54 = vld [vmem:[#allocation2] sm:$0x3]
      %56 = vrot.lane.b32.xlu0 %v54, 96
      %v57 = vpop.permute.xlu0 %56
      %v59 = vadd.f32 %v54, %v57
      %60 = vrot.lane.b32.xlu0 %v54, 64
      %v61 = vpop.permute.xlu0 %60
      %v63 = vadd.f32 %v59, %v61
      %64 = vrot.lane.b32.xlu0 %v54, 32
      %v65 = vpop.permute.xlu0 %64
      %v67 = vadd.f32 %v63, %v65
      %v68 = vmul.f32 %v67, 0.125
      %v69 = vld [vmem:[%s1] sm:$0xff]
      %v70 = vld [vmem:[%s1 + $0x8] sm:$0xff]
      %v71 = vld [vmem:[%s1 + $0x10] sm:$0xff]
      %v72 = vld [vmem:[%s1 + $0x18] sm:$0xff]
      %v73 = vld [vmem:[%s2] sm:$0x1]
      %v75 = vlaneseq
      %v76 = vshrl.u32 %v75, 7
      %v77 = vsub.s32 0, %v76
      %v78 = vrot.slane %v73, %v77
      %vm80 = vcmask 261120
      %v82 = vsel %vm80, %v68, 0
      %84 = vmatprep.subr.mxu0 0.0
      %85 = vmatpush1.msra.mxu0 0.0
      %86 = vmatprep.subr.mxu0 0.0
      %87 = vmatpush1.msra.mxu0 0.0
      %88 = vmatprep.subr.mxu0 0.0
      %89 = vmatpush1.msra.mxu0 0.0
      %90 = vmatprep.subr.mxu0 0.0
      %91 = vmatpush1.msra.mxu0 0.0
      %92 = vmatprep.subr.mxu0 0.0
      %93 = vmatpush1.msra.mxu0 0.0
      %94 = vmatprep.subr.mxu0 0.0
      %95 = vmatpush1.msra.mxu0 0.0
      %96 = vmatprep.subr.mxu0 0.0
      %97 = vmatpush1.msra.mxu0 0.0
      %98 = vmatprep.subr.mxu0 0.0
      %99 = vmatpush1.msra.mxu0 0.0
      %100 = vmatprep.subr.mxu0 0.0
      %101 = vmatpush1.msra.mxu0 0.0
      %102 = vmatprep.subr.mxu0 0.0
      %103 = vmatpush1.msra.mxu0 0.0
      %104 = vmatprep.subr.mxu0 0.0
      %105 = vmatpush1.msra.mxu0 0.0
      %106 = vmatprep.subr.mxu0 0.0
      %107 = vmatpush1.msra.mxu0 0.0
      %108 = vmatprep.subr.mxu0 0.0
      %109 = vmatpush1.msra.mxu0 %v72
      %110 = vmatprep.subr.mxu0 0.0
      %111 = vmatpush1.msra.mxu0 %v71
      %112 = vmatprep.subr.mxu0 0.0
      %113 = vmatpush1.msra.mxu0 %v70
      %114 = vmatprep.subr.mxu0 0.0
      %115 = vmatpush1.msra.mxu0 %v69
      %116 = vmatprep.subr.mxu0 0.0
      %117 = vmatpush2.msra.mxu0 0.0
      %118 = vmatprep.subr.mxu0 0.0
      %119 = vmatpush2.msra.mxu0 0.0
      %120 = vmatprep.subr.mxu0 0.0
      %121 = vmatpush2.msra.mxu0 0.0
      %122 = vmatprep.subr.mxu0 0.0
      %123 = vmatpush2.msra.mxu0 0.0
      %124 = vmatprep.subr.mxu0 0.0
      %125 = vmatpush2.msra.mxu0 0.0
      %126 = vmatprep.subr.mxu0 0.0
      %127 = vmatpush2.msra.mxu0 0.0
      %128 = vmatprep.subr.mxu0 0.0
      %129 = vmatpush2.msra.mxu0 0.0
      %130 = vmatprep.subr.mxu0 0.0
      %131 = vmatpush2.msra.mxu0 0.0
      %132 = vmatprep.subr.mxu0 0.0
      %133 = vmatpush2.msra.mxu0 0.0
      %134 = vmatprep.subr.mxu0 0.0
      %135 = vmatpush2.msra.mxu0 0.0
      %136 = vmatprep.subr.mxu0 0.0
      %137 = vmatpush2.msra.mxu0 0.0
      %138 = vmatprep.subr.mxu0 0.0
      %139 = vmatpush2.msra.mxu0 0.0
      %140 = vmatprep.subr.mxu0 0.0
      %141 = vmatpush2.msra.mxu0 0.0
      %142 = vmatprep.subr.mxu0 0.0
      %143 = vmatpush2.msra.mxu0 0.0
      %144 = vmatprep.subr.mxu0 0.0
      %145 = vmatpush2.msra.mxu0 0.0
      %146 = vmatprep.subr.mxu0 0.0
      %147 = vmatpush2.msra.mxu0 0.0
      %148 = vmatprep.mubr.f32.mxu0 0.0
      %149 = vmatmul.mubr.f32.gmra.mxu0 %v82
      %v150 = vpop.f32.mrf.mxu0
      %v151 = vadd.f32 %v78, %v150
      %v152 = vpop.f32.mrf.mxu0
      %153 = vdwg.mxu0
      %v154 = vmax.f32 %v151, 0.0
      %v155 = vld [vmem:[%s3] sm:$0xff]
      %v156 = vld [vmem:[%s3 + $0x8] sm:$0xff]
      %v157 = vld [vmem:[%s3 + $0x10] sm:$0xff]
      %v158 = vld [vmem:[%s3 + $0x18] sm:$0xff]
      %v159 = vld [vmem:[%s3 + $0x20] sm:$0xff]
      %v160 = vld [vmem:[%s3 + $0x28] sm:$0xff]
      %v161 = vld [vmem:[%s3 + $0x30] sm:$0xff]
      %v162 = vld [vmem:[%s3 + $0x38] sm:$0xff]
      %v163 = vld [vmem:[%s4] sm:$0x1]
      %v165 = vlaneseq
      %v166 = vshrl.u32 %v165, 7
      %v167 = vsub.s32 0, %v166
      %v168 = vrot.slane %v163, %v167
      %vm170 = vcmask 523264
      %v172 = vsel %vm170, %v154, 0
      %174 = vmatprep.subr.mxu0 0.0
      %175 = vmatpush1.msra.mxu0 0.0
      %176 = vmatprep.subr.mxu0 0.0
      %177 = vmatpush1.msra.mxu0 0.0
      %178 = vmatprep.subr.mxu0 0.0
      %179 = vmatpush1.msra.mxu0 0.0
      %180 = vmatprep.subr.mxu0 0.0
      %181 = vmatpush1.msra.mxu0 0.0
      %182 = vmatprep.subr.mxu0 0.0
      %183 = vmatpush1.msra.mxu0 0.0
      %184 = vmatprep.subr.mxu0 0.0
      %185 = vmatpush1.msra.mxu0 0.0
      %186 = vmatprep.subr.mxu0 0.0
      %187 = vmatpush1.msra.mxu0 0.0
      %188 = vmatprep.subr.mxu0 0.0
      %189 = vmatpush1.msra.mxu0 0.0
      %190 = vmatprep.subr.mxu0 0.0
      %191 = vmatpush1.msra.mxu0 %v162
      %192 = vmatprep.subr.mxu0 0.0
      %193 = vmatpush1.msra.mxu0 %v161
      %194 = vmatprep.subr.mxu0 0.0
      %195 = vmatpush1.msra.mxu0 %v160
      %196 = vmatprep.subr.mxu0 0.0
      %197 = vmatpush1.msra.mxu0 %v159
      %198 = vmatprep.subr.mxu0 0.0
      %199 = vmatpush1.msra.mxu0 %v158
      %200 = vmatprep.subr.mxu0 0.0
      %201 = vmatpush1.msra.mxu0 %v157
      %202 = vmatprep.subr.mxu0 0.0
      %203 = vmatpush1.msra.mxu0 %v156
      %204 = vmatprep.subr.mxu0 0.0
      %205 = vmatpush1.msra.mxu0 %v155
      %206 = vmatprep.subr.mxu0 0.0
      %207 = vmatpush2.msra.mxu0 0.0
      %208 = vmatprep.subr.mxu0 0.0
      %209 = vmatpush2.msra.mxu0 0.0
      %210 = vmatprep.subr.mxu0 0.0
      %211 = vmatpush2.msra.mxu0 0.0
      %212 = vmatprep.subr.mxu0 0.0
      %213 = vmatpush2.msra.mxu0 0.0
      %214 = vmatprep.subr.mxu0 0.0
      %215 = vmatpush2.msra.mxu0 0.0
      %216 = vmatprep.subr.mxu0 0.0
      %217 = vmatpush2.msra.mxu0 0.0
      %218 = vmatprep.subr.mxu0 0.0
      %219 = vmatpush2.msra.mxu0 0.0
      %220 = vmatprep.subr.mxu0 0.0
      %221 = vmatpush2.msra.mxu0 0.0
      %222 = vmatprep.subr.mxu0 0.0
      %223 = vmatpush2.msra.mxu0 0.0
      %224 = vmatprep.subr.mxu0 0.0
      %225 = vmatpush2.msra.mxu0 0.0
      %226 = vmatprep.subr.mxu0 0.0
      %227 = vmatpush2.msra.mxu0 0.0
      %228 = vmatprep.subr.mxu0 0.0
      %229 = vmatpush2.msra.mxu0 0.0
      %230 = vmatprep.subr.mxu0 0.0
      %231 = vmatpush2.msra.mxu0 0.0
      %232 = vmatprep.subr.mxu0 0.0
      %233 = vmatpush2.msra.mxu0 0.0
      %234 = vmatprep.subr.mxu0 0.0
      %235 = vmatpush2.msra.mxu0 0.0
      %236 = vmatprep.subr.mxu0 0.0
      %237 = vmatpush2.msra.mxu0 0.0
      %238 = vmatprep.mubr.f32.mxu0 0.0
      %239 = vmatmul.mubr.f32.gmra.mxu0 %v172
      %v240 = vpop.f32.mrf.mxu0
      %v241 = vadd.f32 %v168, %v240
      %v242 = vpop.f32.mrf.mxu0
      %243 = vdwg.mxu0
      %vm244 = vcmask 74752
      %245 = vst.msk [vmem:[#allocation3] sm:$0x3] %vm244, %v241
    $region29: #{tpu_custom_call.1} parent=1 // pred_fallthru
      _
    // Predicated region
    $region30: #{tpu_custom_call.1} parent=1 // pred_check
      _
    $region31: #{tpu_custom_call.1} parent=1 // pred_check_branch
      %247 = sbr.rel (0) target = $region33
    $region32: #{tpu_custom_call.1} parent=1 // pred_region
      %s249 = ssub.s32 32, 32
      %250 = vsyncadd [#allocation4], %s249
      %s252 = sshll.u32 [#allocation3], 4
      %s253 = int_to_ptr.vmem [resolvable:$true] %s252
      %255 = dma.vmem_to_hbm [thread:$0]  %s253, 32, %s5, [#allocation4]
    $region33: #{tpu_custom_call.1} parent=1 // pred_fallthru
      _
    // Predicated region
    $region34: #{tpu_custom_call.1} parent=1 // pred_check
      _
    $region35: #{tpu_custom_call.1} parent=1 // pred_check_branch
      %257 = sbr.rel (0) target = $region37
    $region36: #{tpu_custom_call.1} parent=1 // pred_region
      %258 = dma.done [#allocation4], 32
    $region37: #{tpu_custom_call.1} parent=1 // pred_fallthru
      _
    %259 = vsyncpa [#allocation4], 1

</llo_original>
